<compile_context>
chip_gen: v7x
topology: tpu7x:2x2x1
jax: 0.10.0
libtpu: 0.0.40
codegen_flags: <defaults>
</compile_context>

<pallas_src>
import functools

import jax
import jax.numpy as jnp
from jax.experimental import pallas as pl
from jax.experimental.pallas import tpu as pltpu


def _at_loss_kernel(logits_ref, labels_ref, out_ref, *, true_b, tb, need_row_mask):
    """One batch tile: write the partial sum of (loss1 + loss2) over its rows."""
    i = pl.program_id(0)

    # Cast AFTER load; the -1e30 sentinel is only safe in f32 compute.
    logits = logits_ref[...].astype(jnp.float32)           # [TB, C]
    labels = labels_ref[...].astype(jnp.float32)           # [TB, C]
    TB, C = logits.shape

    col = jax.lax.broadcasted_iota(jnp.int32, (TB, C), 1)
    is_col0 = col == 0
    pos = labels > 0.0                                      # raw labels; col 0 via is_col0

    NEG = jnp.float32(-1e30)
    logit0 = logits[:, 0:1]
    label0 = labels[:, 0:1]

    # --- loss1: log-softmax over {positives ∪ threshold col}, weighted by labels
    # (col-0 label is forced to 0 via the cheap column-0 slice corrections).
    # Exact vs the PyTorch reference for hard {0,1} labels.
    logit1 = jnp.where(jnp.logical_or(pos, is_col0), logits, NEG)
    m1 = jnp.max(logit1, axis=-1, keepdims=True)
    lse1 = jnp.log(jnp.sum(jnp.exp(logit1 - m1), axis=-1, keepdims=True)) + m1
    w_sum = jnp.sum(labels, axis=-1, keepdims=True) - label0
    wl_sum = jnp.sum(labels * logits, axis=-1, keepdims=True) - label0 * logit0
    loss1 = w_sum * lse1 - wl_sum                           # [TB, 1]

    # --- loss2: log-softmax over {negatives ∪ threshold col}, gathered at col 0.
    # Column 0 is never masked here, so loss2 = lse2 - logits[:, 0].
    logit2 = jnp.where(jnp.logical_or(jnp.logical_not(pos), is_col0), logits, NEG)
    m2 = jnp.max(logit2, axis=-1, keepdims=True)
    lse2 = jnp.log(jnp.sum(jnp.exp(logit2 - m2), axis=-1, keepdims=True)) + m2
    loss2 = lse2 - logit0                                   # [TB, 1]

    per_row = loss1 + loss2                                 # [TB, 1]
    if need_row_mask:
        # Padded rows of the (partial) last tile contain garbage; a *select*
        # (not arithmetic masking) keeps any inf/NaN out of the partial sum.
        row = jax.lax.broadcasted_iota(jnp.int32, (TB, 1), 0)
        valid = (i * tb + row) < true_b
        per_row = jnp.where(valid, per_row, 0.0)

    out_ref[...] = jnp.sum(per_row, keepdims=True)          # (1, 1) partial sum


def _vmem_capacity_bytes():
    try:
        return int(pltpu.get_tpu_info().vmem_capacity_bytes)
    except Exception:
        return 64 * 1024 * 1024  # conservative (v7x-sized) fallback


def _choose_tile(B, C, logits_dtype, labels_dtype, vmem_cap):
    l_i = jnp.dtype(logits_dtype).itemsize
    b_i = jnp.dtype(labels_dtype).itemsize
    # Sublane packing: 8 rows/vreg for 32-bit, 16 for 16-bit, 32 for 8-bit.
    row_mult = max(8, 32 // min(l_i, b_i))
    if B <= row_mult:
        return B, row_mult

    budget = int(vmem_cap * 0.75)              # ~96 MiB v5e/v6e, ~48 MiB v7x
    bytes_per_row_both = C * (l_i + b_i)
    tb_budget = max(budget // (2 * bytes_per_row_both), 1)   # 2x = double buffering
    # ~4 MiB per input block amortizes the ~0.35us per-grid-step overhead.
    target_block_bytes = 4 * 1024 * 1024
    tb_target = max(target_block_bytes // max(C * max(l_i, b_i), 1), row_mult)

    tb = min(tb_budget, tb_target)
    if tb >= B:
        return B, row_mult
    tb = max(row_mult, (tb // row_mult) * row_mult)
    return int(min(tb, B)), row_mult


def at_loss(logits, labels, *, block_b=None):
    """Pallas implementation of ATLoss.forward. Returns a scalar f32 loss.

    `logits` may be bf16 and `labels` int8/bool (cast to f32 inside the
    kernel) to halve HBM traffic on bandwidth-limited chips.  Labels are
    assumed to be hard {0, 1} multi-labels, as in the PyTorch module's usage.
    """
    B, C = logits.shape
    vmem_cap = _vmem_capacity_bytes()
    tb, row_mult = _choose_tile(B, C, logits.dtype, labels.dtype, vmem_cap)
    if block_b is not None:  # explicit override (tests / tuning)
        tb = min(int(block_b), B)
        if tb < B:
            tb = max(row_mult, (tb // row_mult) * row_mult)

    grid = (pl.cdiv(B, tb),)
    num_tiles = grid[0]

    l_i = jnp.dtype(logits.dtype).itemsize
    b_i = jnp.dtype(labels.dtype).itemsize
    footprint = 2 * tb * C * (l_i + b_i)       # double-buffered input blocks
    vmem_limit = int(min(vmem_cap * 0.85, max(footprint + (8 << 20), 32 << 20)))

    kernel = functools.partial(
        _at_loss_kernel, true_b=B, tb=tb, need_row_mask=(B % tb != 0))

    partials = pl.pallas_call(
        kernel,
        out_shape=jax.ShapeDtypeStruct((num_tiles, 1), jnp.float32),
        grid_spec=pltpu.PrefetchScalarGridSpec(
            num_scalar_prefetch=0,
            grid=grid,
            in_specs=[
                pl.BlockSpec((tb, C), lambda i: (i, 0)),
                pl.BlockSpec((tb, C), lambda i: (i, 0)),
            ],
            out_specs=pl.BlockSpec((1, 1), lambda i: (i, 0)),
        ),
        compiler_params=pltpu.CompilerParams(
            dimension_semantics=("parallel",),
            vmem_limit_bytes=vmem_limit,
        ),
    )(logits, labels)

    # Tiny (num_tiles, 1) reduction + mean in plain JAX.
    return jnp.sum(partials) * jnp.float32(1.0 / B)


def _at_loss_ref(logits, labels):
    """Pure-JAX reference mirroring the PyTorch forward exactly."""
    logits = logits.astype(jnp.float32)
    labels = labels.astype(jnp.float32)
    th_label = jnp.zeros_like(labels).at[:, 0].set(1.0)
    labels = labels.at[:, 0].set(0.0)
    p_mask = labels + th_label
    n_mask = 1.0 - labels
    logit1 = logits - (1.0 - p_mask) * 1e30
    loss1 = -jnp.sum(jax.nn.log_softmax(logit1, axis=-1) * labels, axis=1)
    logit2 = logits - (1.0 - n_mask) * 1e30
    loss2 = -jnp.sum(jax.nn.log_softmax(logit2, axis=-1) * th_label, axis=1)
    return jnp.mean(loss1 + loss2)


if __name__ == "__main__":
    key = jax.random.PRNGKey(0)
    k1, k2, k3, k4 = jax.random.split(key, 4)

    # Case 1: single tile, f32 inputs.
    B, C = 8, 16
    logits = jax.random.normal(k1, (B, C), dtype=jnp.float32)
    labels = jax.random.bernoulli(k2, p=0.3, shape=(B, C)).astype(jnp.float32)
    loss = at_loss(logits, labels)
    jax.block_until_ready(loss)
    ref = _at_loss_ref(logits, labels)
    assert jnp.allclose(loss, ref, rtol=1e-5, atol=1e-5), (loss, ref)

    # Case 2: multi-tile parallel grid with a padded last tile (B % TB != 0).
    B2, C2 = 20, 16
    logits2 = jax.random.normal(k3, (B2, C2), dtype=jnp.float32)
    labels2 = jax.random.bernoulli(k4, p=0.3, shape=(B2, C2)).astype(jnp.float32)
    loss2 = at_loss(logits2, labels2, block_b=8)
    jax.block_until_ready(loss2)
    ref2 = _at_loss_ref(logits2, labels2)
    assert jnp.allclose(loss2, ref2, rtol=1e-5, atol=1e-5), (loss2, ref2)

    # Case 3: narrow input dtypes (bf16 logits, int8 labels) — HBM-traffic path.
    logits3 = logits2.astype(jnp.bfloat16)
    labels3 = labels2.astype(jnp.int8)
    loss3 = at_loss(logits3, labels3)
    jax.block_until_ready(loss3)
    ref3 = _at_loss_ref(logits3.astype(jnp.float32), labels3.astype(jnp.float32))
    assert jnp.allclose(loss3, ref3, rtol=1e-5, atol=1e-4), (loss3, ref3)

    print("KERNEL_OK")
</pallas_src>

<mosaic_0001>
module attributes {stable_mosaic.version = 11 : i64} {
  func.func @_at_loss_kernel(%arg0: i32, %arg1: memref<8x16xf32, #tpu.memory_space<vmem>>, %arg2: memref<8x16xf32, #tpu.memory_space<vmem>>, %arg3: memref<1x1xf32, #tpu.memory_space<vmem>>) attributes {dimension_semantics = [#tpu.dimension_semantics<parallel>], iteration_bounds = array<i64: 1>, scalar_prefetch = 0 : i64, scratch_operands = 0 : i64, tpu.core_type = #tpu.core_type<tc>, window_params = [{transform_indices = @transform_0, window_bounds = array<i64: 8, 16>}, {transform_indices = @transform_1, window_bounds = array<i64: 8, 16>}, {transform_indices = @transform_2, window_bounds = array<i64: 1, 1>}]} {
    %c0 = arith.constant 0 : index
    %c0_0 = arith.constant 0 : index
    %0 = vector.load %arg1[%c0, %c0_0] : memref<8x16xf32, #tpu.memory_space<vmem>>, vector<8x16xf32>
    %c0_1 = arith.constant 0 : index
    %c0_2 = arith.constant 0 : index
    %1 = vector.load %arg2[%c0_1, %c0_2] : memref<8x16xf32, #tpu.memory_space<vmem>>, vector<8x16xf32>
    %2 = tpu.iota {dimensions = array<i32: 1>} : vector<8x16xi32>
    %c0_i32 = arith.constant 0 : i32
    %3 = vector.broadcast %c0_i32 : i32 to vector<8x16xi32>
    %4 = arith.cmpi eq, %2, %3 : vector<8x16xi32>
    %cst = arith.constant 0.000000e+00 : f32
    %5 = vector.broadcast %cst : f32 to vector<8x16xf32>
    %6 = arith.cmpf ogt, %1, %5 : vector<8x16xf32>
    %7 = vector.extract_strided_slice %0 {offsets = [0, 0], sizes = [8, 1], strides = [1, 1]} : vector<8x16xf32> to vector<8x1xf32>
    %8 = vector.extract_strided_slice %1 {offsets = [0, 0], sizes = [8, 1], strides = [1, 1]} : vector<8x16xf32> to vector<8x1xf32>
    %9 = arith.ori %6, %4 : vector<8x16xi1>
    %cst_3 = arith.constant -1.000000e+30 : f32
    %10 = vector.broadcast %cst_3 : f32 to vector<8x16xf32>
    %11 = arith.select %9, %0, %10 : vector<8x16xi1>, vector<8x16xf32>
    %cst_4 = arith.constant dense<0xFF800000> : vector<8xf32>
    %12 = vector.multi_reduction <maximumf>, %11, %cst_4 [1] : vector<8x16xf32> to vector<8xf32>
    %13 = vector.shape_cast %12 : vector<8xf32> to vector<8x1xf32>
    %14 = vector.broadcast %13 : vector<8x1xf32> to vector<8x16xf32>
    %15 = arith.subf %11, %14 : vector<8x16xf32>
    %16 = math.exp %15 : vector<8x16xf32>
    %cst_5 = arith.constant dense<0.000000e+00> : vector<8xf32>
    %17 = vector.multi_reduction <add>, %16, %cst_5 [1] : vector<8x16xf32> to vector<8xf32>
    %18 = vector.shape_cast %17 : vector<8xf32> to vector<8x1xf32>
    %19 = math.log %18 : vector<8x1xf32>
    %20 = arith.addf %19, %13 : vector<8x1xf32>
    %cst_6 = arith.constant dense<0.000000e+00> : vector<8xf32>
    %21 = vector.multi_reduction <add>, %1, %cst_6 [1] : vector<8x16xf32> to vector<8xf32>
    %22 = vector.shape_cast %21 : vector<8xf32> to vector<8x1xf32>
    %23 = arith.subf %22, %8 : vector<8x1xf32>
    %24 = arith.mulf %1, %0 : vector<8x16xf32>
    %cst_7 = arith.constant dense<0.000000e+00> : vector<8xf32>
    %25 = vector.multi_reduction <add>, %24, %cst_7 [1] : vector<8x16xf32> to vector<8xf32>
    %26 = vector.shape_cast %25 : vector<8xf32> to vector<8x1xf32>
    %27 = arith.mulf %8, %7 : vector<8x1xf32>
    %28 = arith.subf %26, %27 : vector<8x1xf32>
    %29 = arith.mulf %23, %20 : vector<8x1xf32>
    %30 = arith.subf %29, %28 : vector<8x1xf32>
    %cst_8 = arith.constant dense<true> : vector<8x16xi1>
    %31 = arith.xori %6, %cst_8 : vector<8x16xi1>
    %32 = arith.ori %31, %4 : vector<8x16xi1>
    %cst_9 = arith.constant -1.000000e+30 : f32
    %33 = vector.broadcast %cst_9 : f32 to vector<8x16xf32>
    %34 = arith.select %32, %0, %33 : vector<8x16xi1>, vector<8x16xf32>
    %cst_10 = arith.constant dense<0xFF800000> : vector<8xf32>
    %35 = vector.multi_reduction <maximumf>, %34, %cst_10 [1] : vector<8x16xf32> to vector<8xf32>
    %36 = vector.shape_cast %35 : vector<8xf32> to vector<8x1xf32>
    %37 = vector.broadcast %36 : vector<8x1xf32> to vector<8x16xf32>
    %38 = arith.subf %34, %37 : vector<8x16xf32>
    %39 = math.exp %38 : vector<8x16xf32>
    %cst_11 = arith.constant dense<0.000000e+00> : vector<8xf32>
    %40 = vector.multi_reduction <add>, %39, %cst_11 [1] : vector<8x16xf32> to vector<8xf32>
    %41 = vector.shape_cast %40 : vector<8xf32> to vector<8x1xf32>
    %42 = math.log %41 : vector<8x1xf32>
    %43 = arith.addf %42, %36 : vector<8x1xf32>
    %44 = arith.subf %43, %7 : vector<8x1xf32>
    %45 = arith.addf %30, %44 : vector<8x1xf32>
    %46 = vector.shape_cast %45 : vector<8x1xf32> to vector<1x8x1xf32>
    %cst_12 = arith.constant dense<0.000000e+00> : vector<1xf32>
    %47 = vector.multi_reduction <add>, %46, %cst_12 [1, 2] : vector<1x8x1xf32> to vector<1xf32>
    %48 = vector.shape_cast %47 : vector<1xf32> to vector<1x1x1xf32>
    %49 = vector.extract %48[0, 0, 0] : f32 from vector<1x1x1xf32>
    %50 = vector.broadcast %49 : f32 to vector<1x1xf32>
    %c0_13 = arith.constant 0 : index
    %c0_14 = arith.constant 0 : index
    %51 = vector.load %arg3[%c0_13, %c0_14] : memref<1x1xf32, #tpu.memory_space<vmem>>, vector<1x1xf32>
    tpu.vector_store %arg3[%c0_13, %c0_14], %50 {strides = array<i32>} : memref<1x1xf32, #tpu.memory_space<vmem>>, vector<1x1xf32>,
    return
  }
  func.func @transform_0(%arg0: i32) -> (i32, i32) {
    %c0_i32 = arith.constant 0 : i32
    %c0_i32_0 = arith.constant 0 : i32
    return %arg0, %c0_i32 : i32, i32
  }
  func.func @transform_1(%arg0: i32) -> (i32, i32) {
    %c0_i32 = arith.constant 0 : i32
    %c0_i32_0 = arith.constant 0 : i32
    return %arg0, %c0_i32 : i32, i32
  }
  func.func @transform_2(%arg0: i32) -> (i32, i32) {
    %c0_i32 = arith.constant 0 : i32
    %c0_i32_0 = arith.constant 0 : i32
    return %arg0, %c0_i32 : i32, i32
  }
}

</mosaic_0001>

<llo_original>
// kernel: tpu_custom_call.1
$region0: #{tpu_custom_call.1}
  #allocation0 [shape = 'u32[]', space=smem, size = 0x4, offset = 0x4, fixed_abs, tag = 'smem constant byte address 0x4 - core index']
  #allocation1 [shape = 'u32[144,128]{1,0:T(1,128)}', space=vmem, size = 0x12000, scoped, tag = 'internal scratch']
  %s0 = inlined_call_operand.hbm [shape: f32[8,16], index: 0, kind: input, shape index: {}]
  %s1 = inlined_call_operand.hbm [shape: f32[8,16], index: 1, kind: input, shape index: {}]
  %s2 = inlined_call_operand.hbm [shape: f32[1,1], index: 2, kind: output, shape index: {}]
  %s3 = sld [smem:[#allocation0]]
  $region26: #{tpu_custom_call.1} parent=0
    _
  %s5 = ssub.s32 1, %s3
  %s6 = scalar_select 0, %s5, %s3
  $region1: #{tpu_custom_call.1} parent=0
    #allocation2 [shape = 'u8[4096]{0}', space=vmem, size = 0x1000, scoped, tag = 'input window, operand 0, single buffered']
    #allocation3 [shape = 's32[1]{0}', space=sflag, size = 0x4, scoped, tag = 'scoped memory for tpu_custom_call.1']
    #allocation4 [shape = 's32[1]{0}', space=sflag, size = 0x4, scoped, tag = 'scoped memory for tpu_custom_call.1']
    #allocation5 [shape = 'u8[4096]{0}', space=vmem, size = 0x1000, scoped, tag = 'input window, operand 1, single buffered']
    #allocation6 [shape = 's32[1]{0}', space=sflag, size = 0x4, scoped, tag = 'scoped memory for tpu_custom_call.1']
    #allocation7 [shape = 'u8[512]{0}', space=vmem, size = 0x400, scoped, tag = 'output window, operand 0, single buffered']
    %7 = vsyncpa [#allocation3], 0
    %8 = vsyncpa [#allocation6], 0
    %9 = vsyncpa [#allocation4], 0
    // Predicated region
    $region2: #{tpu_custom_call.1} parent=1 // pred_check
      _
    $region3: #{tpu_custom_call.1} parent=1 // pred_check_branch
      %11 = sbr.rel (0) target = $region5
    $region4: #{tpu_custom_call.1} parent=1 // pred_region
      %s13 = ssub.s32 128, 128
      %14 = vsyncadd [#allocation3], %s13
      %s16 = sshll.u32 [#allocation2], 4
      %s17 = int_to_ptr.vmem [resolvable:$true] %s16
      %19 = dma.hbm_to_vmem [thread:$0]  %s0, 128, %s17, [#allocation3]
    $region5: #{tpu_custom_call.1} parent=1 // pred_fallthru
      _
    // Predicated region
    $region6: #{tpu_custom_call.1} parent=1 // pred_check
      _
    $region7: #{tpu_custom_call.1} parent=1 // pred_check_branch
      %21 = sbr.rel (0) target = $region9
    $region8: #{tpu_custom_call.1} parent=1 // pred_region
      %s23 = ssub.s32 128, 128
      %24 = vsyncadd [#allocation6], %s23
      %s26 = sshll.u32 [#allocation5], 4
      %s27 = int_to_ptr.vmem [resolvable:$true] %s26
      %29 = dma.hbm_to_vmem [thread:$0]  %s1, 128, %s27, [#allocation6]
    $region9: #{tpu_custom_call.1} parent=1 // pred_fallthru
      _
    // Predicated region
    $region10: #{tpu_custom_call.1} parent=1 // pred_check
      _
    $region11: #{tpu_custom_call.1} parent=1 // pred_check_branch
      %31 = sbr.rel (0) target = $region13
    $region12: #{tpu_custom_call.1} parent=1 // pred_region
      %32 = dma.done [#allocation3], 128
    $region13: #{tpu_custom_call.1} parent=1 // pred_fallthru
      _
    // Predicated region
    $region14: #{tpu_custom_call.1} parent=1 // pred_check
      _
    $region15: #{tpu_custom_call.1} parent=1 // pred_check_branch
      %34 = sbr.rel (0) target = $region17
    $region16: #{tpu_custom_call.1} parent=1 // pred_region
      %35 = dma.done [#allocation6], 128
    $region17: #{tpu_custom_call.1} parent=1 // pred_fallthru
      _
    %v36 = vld [vmem:[#allocation2] sm:$0xff]
    %v37 = vld [vmem:[#allocation5] sm:$0xff]
    %v38 = vlaneseq
    %v39 = vand.u32 %v38, 127
    %vm40 = vcmp.eq.s32.totalorder %v39, 0
    %vm41 = vcmp.gt.f32.partialorder %v37, 0.0
    %vm42 = vmor %vm41, %vm40
    %v43 = vsel %vm42, %v36, -1e+30
    %vm44 = vcmask 130048
    %v45 = vsel %vm44, %v43, -inf
    %46 = vmax.xlane.f32.xlu0 %v45
    %v47 = vpop.xlane.xlu0 %46
    %v48 = vsub.f32 %v43, %v47
    %v49 = vmul.f32 %v48, 1.442695
    %v50 = vpow.pop %v49
    %v51 = vsel %vm44, %v50, 0.0
    %52 = vadd.xlane.f32.xlu0 %v51
    %v53 = vpop.xlane.xlu0 %52
    %v54 = vlog2.pop %v53
    %v55 = vmul.f32 %v54, 0.6931472
    %v56 = vadd.f32 %v55, %v47
    %v57 = vsel %vm44, %v37, 0.0
    %58 = vadd.xlane.f32.xlu0 %v57
    %v59 = vpop.xlane.xlu0 %58
    %v60 = vsub.f32 %v59, %v37
    %v61 = vmul.f32 %v37, %v36
    %v62 = vsel %vm44, %v61, 0.0
    %63 = vadd.xlane.f32.xlu0 %v62
    %v64 = vpop.xlane.xlu0 %63
    %v65 = vsub.f32 %v64, %v61
    %v66 = vmul.f32 %v60, %v56
    %v67 = vsub.f32 %v66, %v65
    %vm68 = vmxor %vm41, 1
    %vm69 = vmor %vm68, %vm40
    %v70 = vsel %vm69, %v36, -1e+30
    %v71 = vsel %vm44, %v70, -inf
    %72 = vmax.xlane.f32.xlu0 %v71
    %v73 = vpop.xlane.xlu0 %72
    %v74 = vsub.f32 %v70, %v73
    %v75 = vmul.f32 %v74, 1.442695
    %v76 = vpow.pop %v75
    %v77 = vsel %vm44, %v76, 0.0
    %78 = vadd.xlane.f32.xlu0 %v77
    %v79 = vpop.xlane.xlu0 %78
    %v80 = vlog2.pop %v79
    %v81 = vmul.f32 %v80, 0.6931472
    %v82 = vadd.f32 %v81, %v73
    %v83 = vsub.f32 %v82, %v36
    %v84 = vadd.f32 %v67, %v83
    %vm85 = vcmask 7168
    %v86 = vsel %vm85, %v84, 0.0
    %87 = vadd.xlane.f32.xlu0 %v86
    %v88 = vpop.xlane.xlu0 %87
    %v89 = vrot.slane %v88, 4
    %v90 = vadd.f32 %v88, %v89
    %v91 = vrot.slane %v90, 2
    %v92 = vadd.f32 %v90, %v91
    %v93 = vrot.slane %v92, 1
    %v94 = vadd.f32 %v92, %v93
    %s95 = vtos %v94
    %v96 = vstv %s95
    %vm97 = vcmask 0
    %98 = vst.msk [vmem:[#allocation7] sm:$0x1] %vm97, %v96
    // Predicated region
    $region18: #{tpu_custom_call.1} parent=1 // pred_check
      _
    $region19: #{tpu_custom_call.1} parent=1 // pred_check_branch
      %100 = sbr.rel (0) target = $region21
    $region20: #{tpu_custom_call.1} parent=1 // pred_region
      %s102 = ssub.s32 16, 16
      %103 = vsyncadd [#allocation4], %s102
      %s105 = sshll.u32 [#allocation7], 4
      %s106 = int_to_ptr.vmem [resolvable:$true] %s105
      %108 = dma.vmem_to_hbm [thread:$0]  %s106, 16, %s2, [#allocation4]
    $region21: #{tpu_custom_call.1} parent=1 // pred_fallthru
      _
    // Predicated region
    $region22: #{tpu_custom_call.1} parent=1 // pred_check
      _
    $region23: #{tpu_custom_call.1} parent=1 // pred_check_branch
      %110 = sbr.rel (0) target = $region25
    $region24: #{tpu_custom_call.1} parent=1 // pred_region
      %111 = dma.done [#allocation4], 16
    $region25: #{tpu_custom_call.1} parent=1 // pred_fallthru
      _
    %112 = vsyncpa [#allocation3], 1
    %113 = vsyncpa [#allocation6], 1
    %114 = vsyncpa [#allocation4], 1

</llo_original>
